<compile_context>
chip_gen: v5e
topology: v5e:2x2
jax: 0.10.0
libtpu: 0.0.40
codegen_flags: <defaults>
</compile_context>

<pallas_src>
import functools

import jax
import jax.numpy as jnp
from jax.experimental import pallas as pl
from jax.experimental.pallas import tpu as pltpu

BN_EPS = 1e-5
_LANE = 128
_MIN_BLOCK_BYTES = 1 * 1024 * 1024   # keep per-step (~0.35 us) overhead amortized
_MIN_GRID_STEPS = 4                  # pipelining + megacore (v7x: 2 TensorCores)


# --------------------------------------------------------------------------- #
# Sizing helpers
# --------------------------------------------------------------------------- #
def _vmem_budget():
    """Return (vmem_limit_bytes, per-block byte budget) from the chip's VMEM."""
    try:
        cap = pltpu.get_tpu_info().vmem_capacity_bytes
    except Exception:
        cap = 64 * 1024 * 1024                 # conservative default (v7x size)
    if cap <= 64 * 1024 * 1024:                # v7x: 64 MiB physical VMEM
        limit = 40 * 1024 * 1024
    else:                                      # v5e / v6e: 128 MiB physical VMEM
        limit = 64 * 1024 * 1024
    # 4x block (double-buffered in + out) + ~2x block of f32 temporaries + headroom.
    return limit, limit // 8


def _sublane_align(dtype):
    itemsize = jnp.dtype(dtype).itemsize
    if itemsize >= 4:
        return 8
    if itemsize == 2:
        return 16
    return 32


def _pick_channel_tile(N, C, hw, dtype, budget):
    """Largest aligned divisor of C fitting the budget, preferring >=4 grid steps.

    Returns None when no aligned divisor fits (huge H*W) -> caller must tile HW.
    """
    align = _sublane_align(dtype)
    itemsize = jnp.dtype(dtype).itemsize
    per_c = N * hw * max(4, itemsize)          # account for the f32 upcast temporary
    cands = [d for d in range(1, C + 1)
             if C % d == 0 and (d % align == 0 or d == C)]
    fitting = sorted((d for d in cands if d * per_c <= budget), reverse=True)
    if not fitting:
        return None
    # Largest tile that still gives enough grid steps and a non-tiny block.
    for d in fitting:
        if C // d >= _MIN_GRID_STEPS and d * per_c >= _MIN_BLOCK_BYTES:
            return d
    for d in fitting:
        if C // d >= _MIN_GRID_STEPS:
            return d
    return fitting[0]


# --------------------------------------------------------------------------- #
# Kernels
# --------------------------------------------------------------------------- #
def _fused_kernel(x_ref, gb_ref, o_ref, *, inv_count, apply_f32):
    """Single-pass: per-channel stats + folded scale/shift FMA.

    x_ref:  (N, Ct, HWp)   activations block (full N and HW, Ct channels)
    gb_ref: (N, Ct, 2)     [gamma, beta] from the class embedding
    o_ref:  (N, Ct, HWp)
    """
    x32 = x_ref[...].astype(jnp.float32)
    sx = jnp.sum(x32, axis=(0, 2), keepdims=True)        # (1, Ct, 1)
    sxx = jnp.sum(x32 * x32, axis=(0, 2), keepdims=True)  # (1, Ct, 1)
    mean = sx * inv_count
    var = jnp.maximum(sxx * inv_count - mean * mean, 0.0)
    inv_std = jax.lax.rsqrt(var + BN_EPS)

    gamma = gb_ref[..., 0:1].astype(jnp.float32)           # (N, Ct, 1)
    beta = gb_ref[..., 1:2].astype(jnp.float32)            # (N, Ct, 1)
    scale = gamma * inv_std
    shift = beta - scale * mean

    if apply_f32:
        o_ref[...] = (scale * x32 + shift).astype(o_ref.dtype)
    else:
        # bf16 apply pass: packed vregs, half the VALU work (stats stayed f32).
        dt = o_ref.dtype
        o_ref[...] = scale.astype(dt) * x_ref[...] + shift.astype(dt)


def _stats_kernel(x_ref, stat_ref, sx_ref, sxx_ref, *, inv_count):
    """Fallback pass 1: accumulate per-channel sum / sumsq across HW blocks."""
    h = pl.program_id(1)

    @pl.when(h == 0)
    def _():
        sx_ref[...] = jnp.zeros_like(sx_ref)
        sxx_ref[...] = jnp.zeros_like(sxx_ref)

    x32 = x_ref[...].astype(jnp.float32)
    sx_ref[...] += jnp.sum(x32, axis=(0, 2), keepdims=True)[0]        # (Ct, 1)
    sxx_ref[...] += jnp.sum(x32 * x32, axis=(0, 2), keepdims=True)[0]  # (Ct, 1)

    @pl.when(h == pl.num_programs(1) - 1)
    def _():
        mean = sx_ref[...] * inv_count
        var = jnp.maximum(sxx_ref[...] * inv_count - mean * mean, 0.0)
        inv_std = jax.lax.rsqrt(var + BN_EPS)
        stat_ref[...] = jnp.concatenate([mean, inv_std], axis=-1)      # (Ct, 2)


def _apply_kernel(x_ref, ss_ref, o_ref, *, apply_f32):
    """Fallback pass 2: streaming FMA with precomputed per-(n,c) scale/shift."""
    scale = ss_ref[..., 0:1]                                           # (N, Ct, 1)
    shift = ss_ref[..., 1:2]
    if apply_f32:
        o_ref[...] = (scale * x_ref[...].astype(jnp.float32) + shift).astype(o_ref.dtype)
    else:
        dt = o_ref.dtype
        o_ref[...] = scale.astype(dt) * x_ref[...] + shift.astype(dt)


# --------------------------------------------------------------------------- #
# Wrapper
# --------------------------------------------------------------------------- #
def conditional_norm(x, class_id, weight, bias):
    """x: (N, C, H, W); class_id: (N, K); weight: (2C, K); bias: (2C,)."""
    N, C, H, W = x.shape
    HW = H * W
    dtype = x.dtype
    itemsize = jnp.dtype(dtype).itemsize

    vmem_limit, budget = _vmem_budget()

    # Embedding linear is tiny -> leave to XLA; fuse gamma/beta into one array
    # so a single small DMA per grid step carries both.
    embed = (class_id.astype(jnp.float32) @ weight.astype(jnp.float32).T
             + bias.astype(jnp.float32))                   # (N, 2C)
    gamma = embed[:, :C]                                   # (N, C)
    beta = embed[:, C:]                                    # (N, C)

    inv_count = 1.0 / float(N * HW)                        # true element count
    apply_f32 = dtype != jnp.bfloat16                      # bf16 FMA on bf16 I/O

    # Lane-dense last dim: pad HW to a multiple of 128 (zero padding does not
    # perturb the statistics because inv_count uses the true count).
    hw_pad = -(-HW // _LANE) * _LANE

    ct = _pick_channel_tile(N, C, hw_pad, dtype, budget)

    if ct is not None:
        # ------------- single-pass path: grid over channels only -------------
        x_flat = x.reshape(N, C, HW)
        if hw_pad != HW:
            x_flat = jnp.pad(x_flat, ((0, 0), (0, 0), (0, hw_pad - HW)))
        gb = jnp.stack([gamma, beta], axis=-1)             # (N, C, 2) f32

        cost = pl.CostEstimate(
            flops=5 * N * C * HW,
            transcendentals=C,
            bytes_accessed=2 * N * C * HW * itemsize + int(gb.size) * 4,
        )
        out_flat = pl.pallas_call(
            functools.partial(_fused_kernel, inv_count=inv_count, apply_f32=apply_f32),
            out_shape=jax.ShapeDtypeStruct((N, C, hw_pad), dtype),
            grid_spec=pltpu.PrefetchScalarGridSpec(
                num_scalar_prefetch=0,
                grid=(C // ct,),
                in_specs=[
                    pl.BlockSpec((N, ct, hw_pad), lambda c: (0, c, 0)),
                    pl.BlockSpec((N, ct, 2), lambda c: (0, c, 0)),
                ],
                out_specs=pl.BlockSpec((N, ct, hw_pad), lambda c: (0, c, 0)),
            ),
            compiler_params=pltpu.CompilerParams(
                dimension_semantics=("parallel",),
                vmem_limit_bytes=vmem_limit,
            ),
            cost_estimate=cost,
        )(x_flat, gb)
        return out_flat[..., :HW].reshape(N, C, H, W)

    # ---------- fallback (huge H*W): tile HW; stats pass + apply pass ----------
    align = _sublane_align(dtype)
    ct = min(d for d in range(1, C + 1)
             if C % d == 0 and (d % align == 0 or d == C))
    per_elem = max(4, itemsize)
    max_ht = max(_LANE, (budget // (N * ct * per_elem)) // _LANE * _LANE)
    ht = min(max_ht, hw_pad)
    hw_pad = -(-hw_pad // ht) * ht                          # ht divides padded HW

    x_flat = x.reshape(N, C, HW)
    if hw_pad != HW:
        x_flat = jnp.pad(x_flat, ((0, 0), (0, 0), (0, hw_pad - HW)))

    grid = (C // ct, hw_pad // ht)

    stats = pl.pallas_call(
        functools.partial(_stats_kernel, inv_count=inv_count),
        out_shape=jax.ShapeDtypeStruct((C, 2), jnp.float32),
        grid_spec=pltpu.PrefetchScalarGridSpec(
            num_scalar_prefetch=0,
            grid=grid,
            in_specs=[pl.BlockSpec((N, ct, ht), lambda c, h: (0, c, h))],
            out_specs=pl.BlockSpec((ct, 2), lambda c, h: (c, 0)),
            scratch_shapes=[pltpu.VMEM((ct, 1), jnp.float32),
                            pltpu.VMEM((ct, 1), jnp.float32)],
        ),
        compiler_params=pltpu.CompilerParams(
            dimension_semantics=("parallel", "arbitrary"),
            vmem_limit_bytes=vmem_limit,
        ),
    )(x_flat)

    mean = stats[:, 0][None, :]                             # (1, C)
    inv_std = stats[:, 1][None, :]                          # (1, C)
    scale = gamma * inv_std                                 # (N, C)
    shift = beta - scale * mean                             # (N, C)
    ss = jnp.stack([scale, shift], axis=-1)                 # (N, C, 2) f32

    out_flat = pl.pallas_call(
        functools.partial(_apply_kernel, apply_f32=apply_f32),
        out_shape=jax.ShapeDtypeStruct((N, C, hw_pad), dtype),
        grid_spec=pltpu.PrefetchScalarGridSpec(
            num_scalar_prefetch=0,
            grid=grid,
            in_specs=[
                pl.BlockSpec((N, ct, ht), lambda c, h: (0, c, h)),
                pl.BlockSpec((N, ct, 2), lambda c, h: (0, c, 0)),
            ],
            out_specs=pl.BlockSpec((N, ct, ht), lambda c, h: (0, c, h)),
        ),
        compiler_params=pltpu.CompilerParams(
            dimension_semantics=("parallel", "parallel"),
            vmem_limit_bytes=vmem_limit,
        ),
    )(x_flat, ss)

    return out_flat[..., :HW].reshape(N, C, H, W)


# --------------------------------------------------------------------------- #
# Reference + test
# --------------------------------------------------------------------------- #
def _reference(x, class_id, weight, bias):
    """Pure-JAX reference mirroring the PyTorch forward (training-mode BN)."""
    mean = jnp.mean(x, axis=(0, 2, 3), keepdims=True)
    var = jnp.mean((x - mean) ** 2, axis=(0, 2, 3), keepdims=True)
    x_hat = (x - mean) / jnp.sqrt(var + BN_EPS)
    embed = class_id @ weight.T + bias
    C = x.shape[1]
    gamma = embed[:, :C][:, :, None, None]
    beta = embed[:, C:][:, :, None, None]
    return gamma * x_hat + beta


if __name__ == "__main__":
    # Small shapes consistent with the module.
    N, C, H, W = 2, 4, 16, 16
    K = 8  # n_condition

    key = jax.random.PRNGKey(0)
    kx, kc, kb = jax.random.split(key, 3)

    x = jax.random.normal(kx, (N, C, H, W), dtype=jnp.float32)
    class_id = jax.random.normal(kc, (N, K), dtype=jnp.float32)

    # embed.weight: shape (2C, K); first C input-feature columns = 1, rest = 0
    # (mirrors `embed.weight.data[:, :in_channel] = 1; [..., in_channel:] = 0`).
    weight = jnp.concatenate(
        [jnp.ones((2 * C, C), jnp.float32), jnp.zeros((2 * C, K - C), jnp.float32)],
        axis=1,
    )
    # embed.bias: PyTorch default init U(-1/sqrt(K), 1/sqrt(K)), seeded deterministically.
    bound = 1.0 / (K ** 0.5)
    bias = jax.random.uniform(kb, (2 * C,), jnp.float32, minval=-bound, maxval=bound)

    out = conditional_norm(x, class_id, weight, bias)
    out = jax.block_until_ready(out)

    ref = _reference(x, class_id, weight, bias)
    assert out.shape == (N, C, H, W)
    assert jnp.allclose(out, ref, atol=1e-4, rtol=1e-4), "mismatch vs reference"

    # TODO(synk): BatchNorm2d's running_mean/running_var buffer updates (a
    # training-time side effect) are not modeled; forward output is unaffected.

    print("KERNEL_OK")
</pallas_src>

<mosaic_0001>
module attributes {stable_mosaic.version = 11 : i64} {
  func.func @_fused_kernel(%arg0: i32, %arg1: memref<2x4x256xf32, #tpu.memory_space<vmem>>, %arg2: memref<2x4x2xf32, #tpu.memory_space<vmem>>, %arg3: memref<2x4x256xf32, #tpu.memory_space<vmem>>) attributes {dimension_semantics = [#tpu.dimension_semantics<parallel>], iteration_bounds = array<i64: 1>, scalar_prefetch = 0 : i64, scratch_operands = 0 : i64, tpu.core_type = #tpu.core_type<tc>, window_params = [{transform_indices = @transform_0, window_bounds = array<i64: 2, 4, 256>}, {transform_indices = @transform_1, window_bounds = array<i64: 2, 4, 2>}, {transform_indices = @transform_2, window_bounds = array<i64: 2, 4, 256>}]} {
    %c0 = arith.constant 0 : index
    %c0_0 = arith.constant 0 : index
    %c0_1 = arith.constant 0 : index
    %0 = vector.load %arg1[%c0, %c0_0, %c0_1] : memref<2x4x256xf32, #tpu.memory_space<vmem>>, vector<2x4x256xf32>
    %cst = arith.constant dense<0.000000e+00> : vector<4xf32>
    %1 = vector.multi_reduction <add>, %0, %cst [0, 2] : vector<2x4x256xf32> to vector<4xf32>
    %2 = vector.shape_cast %1 : vector<4xf32> to vector<1x4x1xf32>
    %3 = arith.mulf %0, %0 : vector<2x4x256xf32>
    %cst_2 = arith.constant dense<0.000000e+00> : vector<4xf32>
    %4 = vector.multi_reduction <add>, %3, %cst_2 [0, 2] : vector<2x4x256xf32> to vector<4xf32>
    %5 = vector.shape_cast %4 : vector<4xf32> to vector<1x4x1xf32>
    %cst_3 = arith.constant 0.001953125 : f32
    %6 = vector.broadcast %cst_3 : f32 to vector<1x4x1xf32>
    %7 = arith.mulf %2, %6 : vector<1x4x1xf32>
    %cst_4 = arith.constant 0.001953125 : f32
    %8 = vector.broadcast %cst_4 : f32 to vector<1x4x1xf32>
    %9 = arith.mulf %5, %8 : vector<1x4x1xf32>
    %10 = arith.mulf %7, %7 : vector<1x4x1xf32>
    %11 = arith.subf %9, %10 : vector<1x4x1xf32>
    %cst_5 = arith.constant 0.000000e+00 : f32
    %12 = vector.broadcast %cst_5 : f32 to vector<1x4x1xf32>
    %13 = arith.maximumf %11, %12 : vector<1x4x1xf32>
    %cst_6 = arith.constant 9.99999974E-6 : f32
    %14 = vector.broadcast %cst_6 : f32 to vector<1x4x1xf32>
    %15 = arith.addf %13, %14 : vector<1x4x1xf32>
    %16 = math.rsqrt %15 : vector<1x4x1xf32>
    %c0_7 = arith.constant 0 : index
    %c0_8 = arith.constant 0 : index
    %c0_9 = arith.constant 0 : index
    %17 = vector.load %arg2[%c0_7, %c0_8, %c0_9] : memref<2x4x2xf32, #tpu.memory_space<vmem>>, vector<2x4x1xf32>
    %c0_10 = arith.constant 0 : index
    %c0_11 = arith.constant 0 : index
    %c1 = arith.constant 1 : index
    %18 = vector.load %arg2[%c0_10, %c0_11, %c1] : memref<2x4x2xf32, #tpu.memory_space<vmem>>, vector<2x4x1xf32>
    %19 = vector.broadcast %16 : vector<1x4x1xf32> to vector<2x4x1xf32>
    %20 = arith.mulf %17, %19 : vector<2x4x1xf32>
    %21 = vector.broadcast %7 : vector<1x4x1xf32> to vector<2x4x1xf32>
    %22 = arith.mulf %20, %21 : vector<2x4x1xf32>
    %23 = arith.subf %18, %22 : vector<2x4x1xf32>
    %24 = vector.broadcast %20 : vector<2x4x1xf32> to vector<2x4x256xf32>
    %25 = arith.mulf %24, %0 : vector<2x4x256xf32>
    %26 = vector.broadcast %23 : vector<2x4x1xf32> to vector<2x4x256xf32>
    %27 = arith.addf %25, %26 : vector<2x4x256xf32>
    %c0_12 = arith.constant 0 : index
    %c0_13 = arith.constant 0 : index
    %c0_14 = arith.constant 0 : index
    %28 = vector.load %arg3[%c0_12, %c0_13, %c0_14] : memref<2x4x256xf32, #tpu.memory_space<vmem>>, vector<2x4x256xf32>
    tpu.vector_store %arg3[%c0_12, %c0_13, %c0_14], %27 {strides = array<i32>} : memref<2x4x256xf32, #tpu.memory_space<vmem>>, vector<2x4x256xf32>,
    return
  }
  func.func @transform_0(%arg0: i32) -> (i32, i32, i32) {
    %c0_i32 = arith.constant 0 : i32
    %c0_i32_0 = arith.constant 0 : i32
    %c0_i32_1 = arith.constant 0 : i32
    return %c0_i32, %arg0, %c0_i32_0 : i32, i32, i32
  }
  func.func @transform_1(%arg0: i32) -> (i32, i32, i32) {
    %c0_i32 = arith.constant 0 : i32
    %c0_i32_0 = arith.constant 0 : i32
    %c0_i32_1 = arith.constant 0 : i32
    return %c0_i32, %arg0, %c0_i32_0 : i32, i32, i32
  }
  func.func @transform_2(%arg0: i32) -> (i32, i32, i32) {
    %c0_i32 = arith.constant 0 : i32
    %c0_i32_0 = arith.constant 0 : i32
    %c0_i32_1 = arith.constant 0 : i32
    return %c0_i32, %arg0, %c0_i32_0 : i32, i32, i32
  }
}

</mosaic_0001>

<llo_original>
// kernel: tpu_custom_call.1
$region0: #{tpu_custom_call.1}
  #allocation0 [shape = 'u32[]', space=smem, size = 0x4, offset = 0x4, fixed_abs, tag = 'smem constant byte address 0x4 - core index']
  #allocation1 [shape = 'u32[72,128]{1,0:T(1,128)}', space=vmem, size = 0x9000, scoped, tag = 'internal scratch']
  %s0 = inlined_call_operand.hbm [shape: f32[2,4,256], index: 0, kind: input, shape index: {}]
  %s1 = inlined_call_operand.vmem [shape: f32[2,4,2], index: 1, kind: input, shape index: {}]
  %s2 = inlined_call_operand.hbm [shape: f32[2,4,256], index: 2, kind: output, shape index: {}]
  %s3 = sld [smem:[#allocation0]]
  $region22: #{tpu_custom_call.1} parent=0
    _
  %s5 = ssub.s32 1, %s3
  %s6 = scalar_select 0, %s5, %s3
  $region1: #{tpu_custom_call.1} parent=0
    #allocation2 [shape = 'u8[8192]{0}', space=vmem, size = 0x2000, scoped, tag = 'input window, operand 0, single buffered']
    #allocation3 [shape = 's32[1]{0}', space=sflag, size = 0x4, scoped, tag = 'scoped memory for tpu_custom_call.1']
    #allocation4 [shape = 's32[1]{0}', space=sflag, size = 0x4, scoped, tag = 'scoped memory for tpu_custom_call.1']
    #allocation5 [shape = 'u8[8192]{0}', space=vmem, size = 0x2000, scoped, tag = 'output window, operand 0, single buffered']
    %7 = vsyncpa [#allocation3], 0
    %8 = vsyncpa [#allocation4], 0
    // Predicated region
    $region2: #{tpu_custom_call.1} parent=1 // pred_check
      _
    $region3: #{tpu_custom_call.1} parent=1 // pred_check_branch
      %10 = sbr.rel (0) target = $region5
    $region4: #{tpu_custom_call.1} parent=1 // pred_region
      %12 = vsyncadd [#allocation3], 0
      %s13 = sshll.u32 %s0, 4
      %s14 = int_to_ptr.hbm [resolvable:$true] %s13
      %s15 = sshll.u32 [#allocation2], 4
      %s16 = int_to_ptr.vmem [resolvable:$true] %s15
      %21 = dma.hbm_to_vmem [thread:$0]  %s14, 256, %s16, [#allocation3], 128, 128, 8
    $region5: #{tpu_custom_call.1} parent=1 // pred_fallthru
      _
    // Predicated region
    $region6: #{tpu_custom_call.1} parent=1 // pred_check
      _
    $region7: #{tpu_custom_call.1} parent=1 // pred_check_branch
      %23 = sbr.rel (0) target = $region9
    $region8: #{tpu_custom_call.1} parent=1 // pred_region
      _
    $region9: #{tpu_custom_call.1} parent=1 // pred_fallthru
      _
    // Predicated region
    $region10: #{tpu_custom_call.1} parent=1 // pred_check
      _
    $region11: #{tpu_custom_call.1} parent=1 // pred_check_branch
      %25 = sbr.rel (0) target = $region13
    $region12: #{tpu_custom_call.1} parent=1 // pred_region
      %27 = dma.done [#allocation3], 256
    $region13: #{tpu_custom_call.1} parent=1 // pred_fallthru
      _
    %v28 = vld [vmem:[#allocation2] sm:$0xff]
    %v29 = vld [vmem:[#allocation2 + $0x8] sm:$0xff]
    %32 = vst [vmem:[#allocation1] ss:$2 sm:$0xff] %v28
    %v33 = vld.sshfl [vmem:[#allocation1] sm:$0xff pattern:$0x75316420]
    %v34 = vld.sshfl [vmem:[#allocation1 + $0x8] sm:$0xff pattern:$0x75316420]
    %s35 = scalar_lea.vmem [#allocation1], 16
    %36 = vst [vmem:[%s35] ss:$2 sm:$0xff] %v29
    %v37 = vld.sshfl [vmem:[#allocation1 + $0x10] sm:$0xff pattern:$0x75316420]
    %v38 = vld.sshfl [vmem:[#allocation1 + $0x18] sm:$0xff pattern:$0x75316420]
    %vm43 = vcmask 1043456
    %v44 = vsel %vm43, %v33, 0.0
    %v45 = vsel %vm43, %v34, 0.0
    %v46 = vadd.f32 %v44, %v45
    %v47 = vsel %vm43, %v37, 0.0
    %v48 = vadd.f32 %v46, %v47
    %v49 = vsel %vm43, %v38, 0.0
    %v50 = vadd.f32 %v48, %v49
    %51 = vadd.xlane.f32.xlu0 %v50
    %v52 = vpop.xlane.xlu0 %51
    %v53 = vmul.f32 %v28, %v28
    %v54 = vmul.f32 %v29, %v29
    %57 = vst [vmem:[#allocation1] ss:$2 sm:$0xff] %v53
    %v58 = vld.sshfl [vmem:[#allocation1] sm:$0xff pattern:$0x75316420]
    %v59 = vld.sshfl [vmem:[#allocation1 + $0x8] sm:$0xff pattern:$0x75316420]
    %s60 = scalar_lea.vmem [#allocation1], 16
    %61 = vst [vmem:[%s60] ss:$2 sm:$0xff] %v54
    %v62 = vld.sshfl [vmem:[#allocation1 + $0x10] sm:$0xff pattern:$0x75316420]
    %v63 = vld.sshfl [vmem:[#allocation1 + $0x18] sm:$0xff pattern:$0x75316420]
    %v68 = vsel %vm43, %v58, 0.0
    %v69 = vsel %vm43, %v59, 0.0
    %v70 = vadd.f32 %v68, %v69
    %v71 = vsel %vm43, %v62, 0.0
    %v72 = vadd.f32 %v70, %v71
    %v73 = vsel %vm43, %v63, 0.0
    %v74 = vadd.f32 %v72, %v73
    %75 = vadd.xlane.f32.xlu0 %v74
    %v76 = vpop.xlane.xlu0 %75
    %v77 = vmul.f32 %v52, 0.001953125
    %v78 = vmul.f32 %v76, 0.001953125
    %v79 = vmul.f32 %v77, %v77
    %v80 = vsub.f32 %v78, %v79
    %v81 = vmax.f32 %v80, 0.0
    %v82 = vadd.f32 %v81, 1e-05
    %v83 = vrsqrt.pop %v82
    %v84 = vmul.f32 %v83, %v82
    %v85 = vmul.f32 %v84, %v83
    %v86 = vmul.f32 0.5, %v85
    %v87 = vsub.f32 1.5, %v86
    %v88 = vmul.f32 %v83, %v87
    %vm89 = vweird.f32 %v82
    %vm90 = vweird.f32 %v83
    %vm91 = vmor %vm89, %vm90
    %v92 = vsel %vm91, %v83, %v88
    %v93 = vld [vmem:[%s1] sm:$0xf]
    %v94 = vld [vmem:[%s1 + $0x4] sm:$0xf]
    %v95 = vmul.f32 %v93, %v92
    %v96 = vmul.f32 %v94, %v92
    %v97 = vmul.f32 %v95, %v77
    %v98 = vmul.f32 %v96, %v77
    %101 = vrot.lane.b32.xlu0 %v97, 1
    %v102 = vpop.permute.xlu0 %101
    %103 = vrot.lane.b32.xlu0 %v98, 1
    %v104 = vpop.permute.xlu0 %103
    %v107 = vsub.f32 %v93, %v102
    %v108 = vsub.f32 %v94, %v104
    %110 = vset.pattern.permute.xlu0 0
    %111 = vperm.xlu0 %110, %v95
    %v112 = vpop.permute.xlu0 %111
    %115 = vset.pattern.permute.xlu0 0
    %116 = vperm.xlu0 %115, %v96
    %v117 = vpop.permute.xlu0 %116
    %119 = vst [vmem:[#allocation1] ss:$2 sm:$0xff] %v28
    %v120 = vld.sshfl [vmem:[#allocation1] sm:$0xff pattern:$0x75316420]
    %v121 = vld.sshfl [vmem:[#allocation1 + $0x8] sm:$0xff pattern:$0x75316420]
    %s122 = scalar_lea.vmem [#allocation1], 16
    %123 = vst [vmem:[%s122] ss:$2 sm:$0xff] %v29
    %v124 = vld.sshfl [vmem:[#allocation1 + $0x10] sm:$0xff pattern:$0x75316420]
    %v125 = vld.sshfl [vmem:[#allocation1 + $0x18] sm:$0xff pattern:$0x75316420]
    %v130 = vmul.f32 %v112, %v120
    %v131 = vmul.f32 %v112, %v121
    %v132 = vmul.f32 %v117, %v124
    %v133 = vmul.f32 %v117, %v125
    %135 = vset.pattern.permute.xlu0 1
    %136 = vperm.xlu0 %135, %v107
    %v137 = vpop.permute.xlu0 %136
    %140 = vset.pattern.permute.xlu0 1
    %141 = vperm.xlu0 %140, %v108
    %v142 = vpop.permute.xlu0 %141
    %v144 = vadd.f32 %v130, %v137
    %v145 = vadd.f32 %v131, %v137
    %v146 = vadd.f32 %v132, %v142
    %v147 = vadd.f32 %v133, %v142
    %v152 = vrot.slane %v145, 4
    %v153 = vrot.slane %v147, 4
    %v154 = vsel %vm43, %v144, %v152
    %v155 = vsel %vm43, %v146, %v153
    %158 = vst [vmem:[#allocation5] sm:$0xff] %v154
    %159 = vst [vmem:[#allocation5 + $0x8] sm:$0xff] %v155
    // Predicated region
    $region14: #{tpu_custom_call.1} parent=1 // pred_check
      _
    $region15: #{tpu_custom_call.1} parent=1 // pred_check_branch
      %161 = sbr.rel (0) target = $region17
    $region16: #{tpu_custom_call.1} parent=1 // pred_region
      %163 = vsyncadd [#allocation4], 0
      %s164 = sshll.u32 [#allocation5], 4
      %s165 = int_to_ptr.vmem [resolvable:$true] %s164
      %s166 = sshll.u32 %s2, 4
      %s167 = int_to_ptr.hbm [resolvable:$true] %s166
      %172 = dma.vmem_to_hbm [thread:$0]  %s165, 256, %s167, [#allocation4], 128, 128, 8
    $region17: #{tpu_custom_call.1} parent=1 // pred_fallthru
      _
    // Predicated region
    $region18: #{tpu_custom_call.1} parent=1 // pred_check
      _
    $region19: #{tpu_custom_call.1} parent=1 // pred_check_branch
      %174 = sbr.rel (0) target = $region21
    $region20: #{tpu_custom_call.1} parent=1 // pred_region
      %176 = dma.done [#allocation4], 256
    $region21: #{tpu_custom_call.1} parent=1 // pred_fallthru
      _
    %177 = vsyncpa [#allocation3], 1
    %178 = vsyncpa [#allocation4], 1

</llo_original>
